<compile_context>
chip_gen: v5e
topology: v5e:2x2
jax: 0.10.0
libtpu: 0.0.40
codegen_flags: <defaults>
</compile_context>

<pallas_src>
import numpy as np
import jax
import jax.numpy as jnp
from jax.experimental import pallas as pl
from jax.experimental.pallas import tpu as pltpu

EPS = 1e-5


def _rup(v, m):
    return (v + m - 1) // m * m


# ----------------------------------------------------------------------------- host-side glue
def _band_matrices(w_oihw, Wp, C, Lp):
    """Per vertical tap ky, an (Lp, Lp) block-band matrix on the lane axis implementing the 3
    horizontal taps + channel mixing.  Pad-w and extra-pad output columns are zero."""
    w = np.asarray(w_oihw, np.float32)              # (Cout, Cin, 3, 3), torch OIHW
    wk = np.transpose(w, (2, 3, 1, 0))              # (ky, kx, Cin, Cout)
    L = Wp * C
    M = np.zeros((3, Lp, Lp), np.float32)
    for ky in range(3):
        for kx in range(3):
            d = np.eye(Wp, k=-(kx - 1), dtype=np.float32)   # input w = output w + (kx-1)
            d[:, 0] = 0.0
            d[:, Wp - 1] = 0.0                               # no output at pad columns
            M[ky, :L, :L] += np.kron(d, wk[ky, kx])
    return M


def _channel_reduce_matrices(Wp, C, Lp):
    """S (Lp, C): selects interior-w lanes per channel.  T = S^T (C, Lp): broadcasts per-channel
    scalars back to the wide lane layout (zero at pad / extra lanes)."""
    v = np.ones((Wp, 1), np.float32)
    v[0, 0] = 0.0
    v[-1, 0] = 0.0
    S = np.zeros((Lp, C), np.float32)
    S[: Wp * C, :] = np.kron(v, np.eye(C, dtype=np.float32))
    return S, np.ascontiguousarray(S.T)


# ----------------------------------------------------------------------------- kernel
def make_residual_block_kernel(N, H, W, C, Rp, Lp):
    Hp = H + 2
    Rr = N * Hp
    inv_count = 1.0 / float(N * H * W)          # BN normalizes over N*H*W interior positions

    def conv3x3(x_f32, m_ref):
        # vertical taps via XLU sublane rotations; wrapped rows are zero pad rows -> exact.
        xb = x_f32.astype(jnp.bfloat16)
        xup = pltpu.roll(x_f32, shift=1, axis=0).astype(jnp.bfloat16)        # xup[r] = x[r-1]
        xdn = pltpu.roll(x_f32, shift=Rp - 1, axis=0).astype(jnp.bfloat16)   # xdn[r] = x[r+1]
        acc = jnp.dot(xup, m_ref[0], preferred_element_type=jnp.float32)
        acc = acc + jnp.dot(xb, m_ref[1], preferred_element_type=jnp.float32)
        acc = acc + jnp.dot(xdn, m_ref[2], preferred_element_type=jnp.float32)
        return acc                               # f32; pad rows hold garbage (masked later)

    def batchnorm(y, rm, s, t, g, shift_w):
        # training-mode BN, stable two-pass variance; stats over interior positions only.
        # Row reductions stay on the VPU/XLU; only tiny (1,*) matmuls touch the MXU.
        col_sum = jnp.sum(y * rm, axis=0, keepdims=True)                       # (1, Lp)
        mean_c = jnp.dot(col_sum, s, preferred_element_type=jnp.float32) * inv_count   # (1, C)
        mean_w = jnp.dot(mean_c, t, preferred_element_type=jnp.float32)        # (1, Lp), 0 at pads
        yc = y - mean_w
        sq_sum = jnp.sum((yc * yc) * rm, axis=0, keepdims=True)                # (1, Lp)
        var_c = jnp.dot(sq_sum, s, preferred_element_type=jnp.float32) * inv_count     # biased var
        scale_c = g * jax.lax.rsqrt(var_c + EPS)                               # (1, C)
        scale_w = jnp.dot(scale_c, t, preferred_element_type=jnp.float32)      # 0 at pad lanes
        return yc * scale_w + shift_w            # fused affine; pad lanes come out exactly 0

    def kernel(x_ref, m1_ref, m2_ref, s_ref, t_ref, gam_ref, shiftw_ref, a_ref, o_ref):
        # interior-row mask in O(1) VPU ops (no per-image unrolled compares)
        r = jax.lax.broadcasted_iota(jnp.int32, (Rp, 1), 0)
        hr = r % Hp
        rm = ((hr >= 1) & (hr <= Hp - 2) & (r < Rr)).astype(jnp.float32)       # (Rp, 1)

        s = s_ref[...]
        t = t_ref[...]
        x = x_ref[...]

        # ---- conv1 + BN1 + PReLU ----
        y1 = conv3x3(x, m1_ref)
        y1 = batchnorm(y1, rm, s, t, gam_ref[0:1, :], shiftw_ref[0:1, :])
        a = a_ref[0]
        act = jnp.where(y1 >= 0.0, y1, a * y1) * rm    # PReLU, then zero pad rows for conv2

        # ---- conv2 + BN2 ----
        y2 = conv3x3(act, m2_ref)
        y2 = batchnorm(y2, rm, s, t, gam_ref[1:2, :], shiftw_ref[1:2, :])

        # ---- residual; pad rows of y2 masked so out is a clean zero-padded slab ----
        o_ref[...] = x + y2 * rm

    return kernel


# ----------------------------------------------------------------------------- wrapper
def residual_block_pallas(x_nchw, w1, b1, g1, bt1, a, w2, b2, g2, bt2):
    # NOTE: b1 / b2 are accepted for interface parity but intentionally unused: under
    # training-mode BatchNorm the conv bias cancels exactly ((y+b) - mean(y+b) = y - mean(y)).
    del b1, b2
    N, C, H, W = x_nchw.shape
    Hp, Wp = H + 2, W + 2
    Rr, L = N * Hp, Wp * C
    Rp, Lp = _rup(Rr, 8), _rup(L, 128)          # lane-dense, sublane-aligned slab
    kernel = make_residual_block_kernel(N, H, W, C, Rp, Lp)

    # glue: NCHW -> zero-padded NHWC -> lane-dense (Rp, Lp) slab
    x_nhwc = jnp.transpose(x_nchw, (0, 2, 3, 1)).astype(jnp.float32)
    x_pad = jnp.pad(x_nhwc, ((0, 0), (1, 1), (1, 1), (0, 0)))
    x_flat = jnp.pad(x_pad.reshape(Rr, L), ((0, Rp - Rr), (0, Lp - L)))

    m1 = jnp.asarray(_band_matrices(w1, Wp, C, Lp), jnp.bfloat16)   # bf16 MXU inputs
    m2 = jnp.asarray(_band_matrices(w2, Wp, C, Lp), jnp.bfloat16)
    S, T = _channel_reduce_matrices(Wp, C, Lp)
    s_k = jnp.asarray(S, jnp.float32)
    t_k = jnp.asarray(T, jnp.float32)

    # pack tiny per-channel params into single operands; beta broadcast precomputed on host
    gam_k = jnp.stack([jnp.reshape(g1, (C,)), jnp.reshape(g2, (C,))]).astype(jnp.float32)  # (2,C)
    shiftw_np = np.stack([
        (np.asarray(bt1, np.float32).reshape(1, C) @ T)[0],
        (np.asarray(bt2, np.float32).reshape(1, C) @ T)[0]])
    shiftw_k = jnp.asarray(shiftw_np, jnp.float32)                  # (2, Lp), 0 at pad lanes
    a_k = jnp.asarray(a, jnp.float32).reshape(1,)                   # PReLU slope via SMEM

    # VMEM limit from resident footprint, clamped to a per-generation-safe ceiling (v7x: 64MiB/TC)
    slab = _rup(Rp, 8) * _rup(Lp, 128) * 4
    band = 2 * 3 * _rup(Lp, 16) * _rup(Lp, 128) * 2
    footprint = 16 * slab + band + (1 << 20)
    vmem_limit = int(min(max(2 * footprint, 8 << 20), 48 << 20))

    vmem = pl.BlockSpec(memory_space=pltpu.MemorySpace.VMEM)
    smem = pl.BlockSpec(memory_space=pltpu.MemorySpace.SMEM)
    # TODO(synk): for shapes where the (Rp, Lp) slab no longer fits VMEM (notably v7x's 64 MiB/TC)
    # add a row/batch-tile grid with a multi-pass BN (stats call + apply call) and
    # dimension_semantics=("parallel", ...); for realistic C (>=32) switch the band-matrix conv
    # to 3 dense per-tap (rows, C)@(C, C) matmuls to keep MXU occupancy near 100%.
    out_flat = pl.pallas_call(
        kernel,
        out_shape=jax.ShapeDtypeStruct((Rp, Lp), jnp.float32),
        in_specs=[vmem, vmem, vmem, vmem, vmem, vmem, vmem, smem],
        out_specs=vmem,
        input_output_aliases={0: 0},
        compiler_params=pltpu.CompilerParams(vmem_limit_bytes=vmem_limit),
    )(x_flat, m1, m2, s_k, t_k, gam_k, shiftw_k, a_k)

    # glue: slab -> padded NHWC -> interior -> NCHW
    out = out_flat[:Rr, :L].reshape(N, Hp, Wp, C)[:, 1:-1, 1:-1, :]
    return jnp.transpose(out, (0, 3, 1, 2))


# ----------------------------------------------------------------------------- reference
def residual_block_reference(x, w1, b1, g1, bt1, a, w2, b2, g2, bt2):
    """Pure-JAX NCHW reference of the torch forward (training-mode BN)."""
    def conv(x, w, b):
        y = jax.lax.conv_general_dilated(
            x, w, window_strides=(1, 1), padding=((1, 1), (1, 1)),
            dimension_numbers=('NCHW', 'OIHW', 'NCHW'),
            precision=jax.lax.Precision.HIGHEST)
        return y + b[None, :, None, None]

    def bn(y, g, bt):
        mean = jnp.mean(y, axis=(0, 2, 3), keepdims=True)
        var = jnp.var(y, axis=(0, 2, 3), keepdims=True)
        return ((y - mean) / jnp.sqrt(var + EPS)
                * g[None, :, None, None] + bt[None, :, None, None])

    y = bn(conv(x, w1, b1), g1, bt1)
    y = jnp.where(y >= 0.0, y, a * y)
    y = bn(conv(y, w2, b2), g2, bt2)
    return x + y


if __name__ == "__main__":
    N, C, H, W = 2, 4, 16, 16
    key = jax.random.PRNGKey(0)
    ks = jax.random.split(key, 9)

    x = jax.random.normal(ks[0], (N, C, H, W), jnp.float32)
    w1 = 0.1 * jax.random.normal(ks[1], (C, C, 3, 3), jnp.float32)
    b1 = 0.1 * jax.random.normal(ks[2], (C,), jnp.float32)
    g1 = 1.0 + 0.1 * jax.random.normal(ks[3], (C,), jnp.float32)
    bt1 = 0.1 * jax.random.normal(ks[4], (C,), jnp.float32)
    a = jnp.float32(0.25)  # nn.PReLU() default init
    w2 = 0.1 * jax.random.normal(ks[5], (C, C, 3, 3), jnp.float32)
    b2 = 0.1 * jax.random.normal(ks[6], (C,), jnp.float32)
    g2 = 1.0 + 0.1 * jax.random.normal(ks[7], (C,), jnp.float32)
    bt2 = 0.1 * jax.random.normal(ks[8], (C,), jnp.float32)

    out = residual_block_pallas(x, w1, b1, g1, bt1, a, w2, b2, g2, bt2)
    out = jax.block_until_ready(out)

    ref = residual_block_reference(x, w1, b1, g1, bt1, a, w2, b2, g2, bt2)
    ref = jax.block_until_ready(ref)

    assert out.shape == ref.shape == (N, C, H, W)
    if not jnp.allclose(out, ref, atol=5e-2, rtol=5e-2):
        raise AssertionError(
            f"mismatch: max abs diff = {float(jnp.max(jnp.abs(out - ref)))}")
    print("KERNEL_OK")
</pallas_src>

<mosaic_0001>
module attributes {stable_mosaic.version = 11 : i64} {
  func.func @kernel(%arg0: memref<40x128xf32, #tpu.memory_space<vmem>>, %arg1: memref<3x128x128xbf16, #tpu.memory_space<vmem>>, %arg2: memref<3x128x128xbf16, #tpu.memory_space<vmem>>, %arg3: memref<128x4xf32, #tpu.memory_space<vmem>>, %arg4: memref<4x128xf32, #tpu.memory_space<vmem>>, %arg5: memref<2x4xf32, #tpu.memory_space<vmem>>, %arg6: memref<2x128xf32, #tpu.memory_space<vmem>>, %arg7: memref<1xf32, #tpu.memory_space<smem>>, %arg8: memref<40x128xf32, #tpu.memory_space<vmem>>) attributes {dimension_semantics = [], scalar_prefetch = 0 : i64, scratch_operands = 0 : i64, tpu.core_type = #tpu.core_type<tc>} {
    %0 = tpu.iota {dimensions = array<i32: 0>} : vector<40x1xi32>
    %c18_i32 = arith.constant 18 : i32
    %c0_i32 = arith.constant 0 : i32
    %1 = arith.cmpi eq, %c18_i32, %c0_i32 : i32
    %c1_i32 = arith.constant 1 : i32
    %2 = arith.select %1, %c1_i32, %c18_i32 : i32
    %3 = vector.broadcast %2 : i32 to vector<40x1xi32>
    %4 = arith.remsi %0, %3 : vector<40x1xi32>
    %c0_i32_0 = arith.constant 0 : i32
    %5 = vector.broadcast %c0_i32_0 : i32 to vector<40x1xi32>
    %6 = arith.cmpi ne, %4, %5 : vector<40x1xi32>
    %c0_i32_1 = arith.constant 0 : i32
    %7 = vector.broadcast %c0_i32_1 : i32 to vector<40x1xi32>
    %8 = arith.cmpi slt, %4, %7 : vector<40x1xi32>
    %c0_i32_2 = arith.constant 0 : i32
    %9 = arith.cmpi slt, %2, %c0_i32_2 : i32
    %10 = vector.broadcast %9 : i1 to vector<40x1xi1>
    %11 = vector.broadcast %10 : vector<40x1xi1> to vector<40x1xi1>
    %12 = arith.xori %8, %11 : vector<40x1xi1>
    %13 = arith.andi %12, %6 : vector<40x1xi1>
    %14 = vector.broadcast %2 : i32 to vector<40x1xi32>
    %15 = arith.addi %4, %14 : vector<40x1xi32>
    %16 = arith.select %13, %15, %4 : vector<40x1xi1>, vector<40x1xi32>
    %c1_i32_3 = arith.constant 1 : i32
    %17 = vector.broadcast %c1_i32_3 : i32 to vector<40x1xi32>
    %18 = arith.cmpi sge, %16, %17 : vector<40x1xi32>
    %c16_i32 = arith.constant 16 : i32
    %19 = vector.broadcast %c16_i32 : i32 to vector<40x1xi32>
    %20 = arith.cmpi sle, %16, %19 : vector<40x1xi32>
    %21 = arith.andi %18, %20 : vector<40x1xi1>
    %c36_i32 = arith.constant 36 : i32
    %22 = vector.broadcast %c36_i32 : i32 to vector<40x1xi32>
    %23 = arith.cmpi slt, %0, %22 : vector<40x1xi32>
    %24 = arith.andi %21, %23 : vector<40x1xi1>
    %25 = arith.extui %24 : vector<40x1xi1> to vector<40x1xi32>
    %26 = arith.sitofp %25 : vector<40x1xi32> to vector<40x1xf32>
    %c0 = arith.constant 0 : index
    %c0_4 = arith.constant 0 : index
    %27 = vector.load %arg3[%c0, %c0_4] : memref<128x4xf32, #tpu.memory_space<vmem>>, vector<128x4xf32>
    %c0_5 = arith.constant 0 : index
    %c0_6 = arith.constant 0 : index
    %28 = vector.load %arg4[%c0_5, %c0_6] : memref<4x128xf32, #tpu.memory_space<vmem>>, vector<4x128xf32>
    %c0_7 = arith.constant 0 : index
    %c0_8 = arith.constant 0 : index
    %29 = vector.load %arg0[%c0_7, %c0_8] : memref<40x128xf32, #tpu.memory_space<vmem>>, vector<40x128xf32>
    %30 = arith.truncf %29 : vector<40x128xf32> to vector<40x128xbf16>
    %c1_i32_9 = arith.constant 1 : i32
    %31 = tpu.dynamic_rotate %29 by %c1_i32_9 dim 0 : vector<40x128xf32>, i32 -> vector<40x128xf32>
    %32 = arith.truncf %31 : vector<40x128xf32> to vector<40x128xbf16>
    %c39_i32 = arith.constant 39 : i32
    %33 = tpu.dynamic_rotate %29 by %c39_i32 dim 0 : vector<40x128xf32>, i32 -> vector<40x128xf32>
    %34 = arith.truncf %33 : vector<40x128xf32> to vector<40x128xbf16>
    %c0_10 = arith.constant 0 : index
    %c0_11 = arith.constant 0 : index
    %c0_12 = arith.constant 0 : index
    %35 = vector.load %arg1[%c0_10, %c0_11, %c0_12] : memref<3x128x128xbf16, #tpu.memory_space<vmem>>, vector<1x128x128xbf16>
    %36 = vector.shape_cast %35 : vector<1x128x128xbf16> to vector<128x128xbf16>
    %cst = arith.constant dense<0.000000e+00> : vector<40x128xf32>
    %37 = tpu.matmul %32, %36, %cst {dimension_numbers = #tpu.dot_dimension_numbers<[1], [0], [0], [1], [0, 0, 1, 1], [], []>} : vector<40x128xbf16>, vector<128x128xbf16>, vector<40x128xf32> -> vector<40x128xf32>
    %c1 = arith.constant 1 : index
    %c0_13 = arith.constant 0 : index
    %c0_14 = arith.constant 0 : index
    %38 = vector.load %arg1[%c1, %c0_13, %c0_14] : memref<3x128x128xbf16, #tpu.memory_space<vmem>>, vector<1x128x128xbf16>
    %39 = vector.shape_cast %38 : vector<1x128x128xbf16> to vector<128x128xbf16>
    %cst_15 = arith.constant dense<0.000000e+00> : vector<40x128xf32>
    %40 = tpu.matmul %30, %39, %cst_15 {dimension_numbers = #tpu.dot_dimension_numbers<[1], [0], [0], [1], [0, 0, 1, 1], [], []>} : vector<40x128xbf16>, vector<128x128xbf16>, vector<40x128xf32> -> vector<40x128xf32>
    %41 = arith.addf %37, %40 : vector<40x128xf32>
    %c2 = arith.constant 2 : index
    %c0_16 = arith.constant 0 : index
    %c0_17 = arith.constant 0 : index
    %42 = vector.load %arg1[%c2, %c0_16, %c0_17] : memref<3x128x128xbf16, #tpu.memory_space<vmem>>, vector<1x128x128xbf16>
    %43 = vector.shape_cast %42 : vector<1x128x128xbf16> to vector<128x128xbf16>
    %cst_18 = arith.constant dense<0.000000e+00> : vector<40x128xf32>
    %44 = tpu.matmul %34, %43, %cst_18 {dimension_numbers = #tpu.dot_dimension_numbers<[1], [0], [0], [1], [0, 0, 1, 1], [], []>} : vector<40x128xbf16>, vector<128x128xbf16>, vector<40x128xf32> -> vector<40x128xf32>
    %45 = arith.addf %41, %44 : vector<40x128xf32>
    %c0_19 = arith.constant 0 : index
    %c0_20 = arith.constant 0 : index
    %46 = vector.load %arg5[%c0_19, %c0_20] : memref<2x4xf32, #tpu.memory_space<vmem>>, vector<1x4xf32>
    %c0_21 = arith.constant 0 : index
    %c0_22 = arith.constant 0 : index
    %47 = vector.load %arg6[%c0_21, %c0_22] : memref<2x128xf32, #tpu.memory_space<vmem>>, vector<1x128xf32>
    %48 = vector.broadcast %26 : vector<40x1xf32> to vector<40x128xf32>
    %49 = arith.mulf %45, %48 : vector<40x128xf32>
    %cst_23 = arith.constant dense<0.000000e+00> : vector<128xf32>
    %50 = vector.multi_reduction <add>, %49, %cst_23 [0] : vector<40x128xf32> to vector<128xf32>
    %51 = vector.shape_cast %50 : vector<128xf32> to vector<1x128xf32>
    %cst_24 = arith.constant dense<0.000000e+00> : vector<1x4xf32>
    %52 = tpu.matmul %51, %27, %cst_24 {dimension_numbers = #tpu.dot_dimension_numbers<[1], [0], [0], [1], [0, 0, 1, 1], [], []>} : vector<1x128xf32>, vector<128x4xf32>, vector<1x4xf32> -> vector<1x4xf32>
    %cst_25 = arith.constant 0.001953125 : f32
    %53 = vector.broadcast %cst_25 : f32 to vector<1x4xf32>
    %54 = arith.mulf %52, %53 : vector<1x4xf32>
    %cst_26 = arith.constant dense<0.000000e+00> : vector<1x128xf32>
    %55 = tpu.matmul %54, %28, %cst_26 {dimension_numbers = #tpu.dot_dimension_numbers<[1], [0], [0], [1], [0, 0, 1, 1], [], []>} : vector<1x4xf32>, vector<4x128xf32>, vector<1x128xf32> -> vector<1x128xf32>
    %56 = vector.broadcast %55 : vector<1x128xf32> to vector<40x128xf32>
    %57 = arith.subf %45, %56 : vector<40x128xf32>
    %58 = arith.mulf %57, %57 : vector<40x128xf32>
    %59 = vector.broadcast %26 : vector<40x1xf32> to vector<40x128xf32>
    %60 = arith.mulf %58, %59 : vector<40x128xf32>
    %cst_27 = arith.constant dense<0.000000e+00> : vector<128xf32>
    %61 = vector.multi_reduction <add>, %60, %cst_27 [0] : vector<40x128xf32> to vector<128xf32>
    %62 = vector.shape_cast %61 : vector<128xf32> to vector<1x128xf32>
    %cst_28 = arith.constant dense<0.000000e+00> : vector<1x4xf32>
    %63 = tpu.matmul %62, %27, %cst_28 {dimension_numbers = #tpu.dot_dimension_numbers<[1], [0], [0], [1], [0, 0, 1, 1], [], []>} : vector<1x128xf32>, vector<128x4xf32>, vector<1x4xf32> -> vector<1x4xf32>
    %cst_29 = arith.constant 0.001953125 : f32
    %64 = vector.broadcast %cst_29 : f32 to vector<1x4xf32>
    %65 = arith.mulf %63, %64 : vector<1x4xf32>
    %cst_30 = arith.constant 9.99999974E-6 : f32
    %66 = vector.broadcast %cst_30 : f32 to vector<1x4xf32>
    %67 = arith.addf %65, %66 : vector<1x4xf32>
    %68 = math.rsqrt %67 : vector<1x4xf32>
    %69 = arith.mulf %46, %68 : vector<1x4xf32>
    %cst_31 = arith.constant dense<0.000000e+00> : vector<1x128xf32>
    %70 = tpu.matmul %69, %28, %cst_31 {dimension_numbers = #tpu.dot_dimension_numbers<[1], [0], [0], [1], [0, 0, 1, 1], [], []>} : vector<1x4xf32>, vector<4x128xf32>, vector<1x128xf32> -> vector<1x128xf32>
    %71 = vector.broadcast %70 : vector<1x128xf32> to vector<40x128xf32>
    %72 = arith.mulf %57, %71 : vector<40x128xf32>
    %73 = vector.broadcast %47 : vector<1x128xf32> to vector<40x128xf32>
    %74 = arith.addf %72, %73 : vector<40x128xf32>
    %c0_32 = arith.constant 0 : index
    %75 = memref.load %arg7[%c0_32] : memref<1xf32, #tpu.memory_space<smem>>
    %cst_33 = arith.constant 0.000000e+00 : f32
    %76 = vector.broadcast %cst_33 : f32 to vector<40x128xf32>
    %77 = arith.cmpf oge, %74, %76 : vector<40x128xf32>
    %78 = vector.broadcast %75 : f32 to vector<40x128xf32>
    %79 = arith.mulf %78, %74 : vector<40x128xf32>
    %80 = arith.select %77, %74, %79 : vector<40x128xi1>, vector<40x128xf32>
    %81 = vector.broadcast %26 : vector<40x1xf32> to vector<40x128xf32>
    %82 = arith.mulf %80, %81 : vector<40x128xf32>
    %83 = arith.truncf %82 : vector<40x128xf32> to vector<40x128xbf16>
    %c1_i32_34 = arith.constant 1 : i32
    %84 = tpu.dynamic_rotate %82 by %c1_i32_34 dim 0 : vector<40x128xf32>, i32 -> vector<40x128xf32>
    %85 = arith.truncf %84 : vector<40x128xf32> to vector<40x128xbf16>
    %c39_i32_35 = arith.constant 39 : i32
    %86 = tpu.dynamic_rotate %82 by %c39_i32_35 dim 0 : vector<40x128xf32>, i32 -> vector<40x128xf32>
    %87 = arith.truncf %86 : vector<40x128xf32> to vector<40x128xbf16>
    %c0_36 = arith.constant 0 : index
    %c0_37 = arith.constant 0 : index
    %c0_38 = arith.constant 0 : index
    %88 = vector.load %arg2[%c0_36, %c0_37, %c0_38] : memref<3x128x128xbf16, #tpu.memory_space<vmem>>, vector<1x128x128xbf16>
    %89 = vector.shape_cast %88 : vector<1x128x128xbf16> to vector<128x128xbf16>
    %cst_39 = arith.constant dense<0.000000e+00> : vector<40x128xf32>
    %90 = tpu.matmul %85, %89, %cst_39 {dimension_numbers = #tpu.dot_dimension_numbers<[1], [0], [0], [1], [0, 0, 1, 1], [], []>} : vector<40x128xbf16>, vector<128x128xbf16>, vector<40x128xf32> -> vector<40x128xf32>
    %c1_40 = arith.constant 1 : index
    %c0_41 = arith.constant 0 : index
    %c0_42 = arith.constant 0 : index
    %91 = vector.load %arg2[%c1_40, %c0_41, %c0_42] : memref<3x128x128xbf16, #tpu.memory_space<vmem>>, vector<1x128x128xbf16>
    %92 = vector.shape_cast %91 : vector<1x128x128xbf16> to vector<128x128xbf16>
    %cst_43 = arith.constant dense<0.000000e+00> : vector<40x128xf32>
    %93 = tpu.matmul %83, %92, %cst_43 {dimension_numbers = #tpu.dot_dimension_numbers<[1], [0], [0], [1], [0, 0, 1, 1], [], []>} : vector<40x128xbf16>, vector<128x128xbf16>, vector<40x128xf32> -> vector<40x128xf32>
    %94 = arith.addf %90, %93 : vector<40x128xf32>
    %c2_44 = arith.constant 2 : index
    %c0_45 = arith.constant 0 : index
    %c0_46 = arith.constant 0 : index
    %95 = vector.load %arg2[%c2_44, %c0_45, %c0_46] : memref<3x128x128xbf16, #tpu.memory_space<vmem>>, vector<1x128x128xbf16>
    %96 = vector.shape_cast %95 : vector<1x128x128xbf16> to vector<128x128xbf16>
    %cst_47 = arith.constant dense<0.000000e+00> : vector<40x128xf32>
    %97 = tpu.matmul %87, %96, %cst_47 {dimension_numbers = #tpu.dot_dimension_numbers<[1], [0], [0], [1], [0, 0, 1, 1], [], []>} : vector<40x128xbf16>, vector<128x128xbf16>, vector<40x128xf32> -> vector<40x128xf32>
    %98 = arith.addf %94, %97 : vector<40x128xf32>
    %c1_48 = arith.constant 1 : index
    %c0_49 = arith.constant 0 : index
    %99 = vector.load %arg5[%c1_48, %c0_49] : memref<2x4xf32, #tpu.memory_space<vmem>>, vector<1x4xf32>
    %c1_50 = arith.constant 1 : index
    %c0_51 = arith.constant 0 : index
    %100 = vector.load %arg6[%c1_50, %c0_51] : memref<2x128xf32, #tpu.memory_space<vmem>>, vector<1x128xf32>
    %101 = vector.broadcast %26 : vector<40x1xf32> to vector<40x128xf32>
    %102 = arith.mulf %98, %101 : vector<40x128xf32>
    %cst_52 = arith.constant dense<0.000000e+00> : vector<128xf32>
    %103 = vector.multi_reduction <add>, %102, %cst_52 [0] : vector<40x128xf32> to vector<128xf32>
    %104 = vector.shape_cast %103 : vector<128xf32> to vector<1x128xf32>
    %cst_53 = arith.constant dense<0.000000e+00> : vector<1x4xf32>
    %105 = tpu.matmul %104, %27, %cst_53 {dimension_numbers = #tpu.dot_dimension_numbers<[1], [0], [0], [1], [0, 0, 1, 1], [], []>} : vector<1x128xf32>, vector<128x4xf32>, vector<1x4xf32> -> vector<1x4xf32>
    %cst_54 = arith.constant 0.001953125 : f32
    %106 = vector.broadcast %cst_54 : f32 to vector<1x4xf32>
    %107 = arith.mulf %105, %106 : vector<1x4xf32>
    %cst_55 = arith.constant dense<0.000000e+00> : vector<1x128xf32>
    %108 = tpu.matmul %107, %28, %cst_55 {dimension_numbers = #tpu.dot_dimension_numbers<[1], [0], [0], [1], [0, 0, 1, 1], [], []>} : vector<1x4xf32>, vector<4x128xf32>, vector<1x128xf32> -> vector<1x128xf32>
    %109 = vector.broadcast %108 : vector<1x128xf32> to vector<40x128xf32>
    %110 = arith.subf %98, %109 : vector<40x128xf32>
    %111 = arith.mulf %110, %110 : vector<40x128xf32>
    %112 = vector.broadcast %26 : vector<40x1xf32> to vector<40x128xf32>
    %113 = arith.mulf %111, %112 : vector<40x128xf32>
    %cst_56 = arith.constant dense<0.000000e+00> : vector<128xf32>
    %114 = vector.multi_reduction <add>, %113, %cst_56 [0] : vector<40x128xf32> to vector<128xf32>
    %115 = vector.shape_cast %114 : vector<128xf32> to vector<1x128xf32>
    %cst_57 = arith.constant dense<0.000000e+00> : vector<1x4xf32>
    %116 = tpu.matmul %115, %27, %cst_57 {dimension_numbers = #tpu.dot_dimension_numbers<[1], [0], [0], [1], [0, 0, 1, 1], [], []>} : vector<1x128xf32>, vector<128x4xf32>, vector<1x4xf32> -> vector<1x4xf32>
    %cst_58 = arith.constant 0.001953125 : f32
    %117 = vector.broadcast %cst_58 : f32 to vector<1x4xf32>
    %118 = arith.mulf %116, %117 : vector<1x4xf32>
    %cst_59 = arith.constant 9.99999974E-6 : f32
    %119 = vector.broadcast %cst_59 : f32 to vector<1x4xf32>
    %120 = arith.addf %118, %119 : vector<1x4xf32>
    %121 = math.rsqrt %120 : vector<1x4xf32>
    %122 = arith.mulf %99, %121 : vector<1x4xf32>
    %cst_60 = arith.constant dense<0.000000e+00> : vector<1x128xf32>
    %123 = tpu.matmul %122, %28, %cst_60 {dimension_numbers = #tpu.dot_dimension_numbers<[1], [0], [0], [1], [0, 0, 1, 1], [], []>} : vector<1x4xf32>, vector<4x128xf32>, vector<1x128xf32> -> vector<1x128xf32>
    %124 = vector.broadcast %123 : vector<1x128xf32> to vector<40x128xf32>
    %125 = arith.mulf %110, %124 : vector<40x128xf32>
    %126 = vector.broadcast %100 : vector<1x128xf32> to vector<40x128xf32>
    %127 = arith.addf %125, %126 : vector<40x128xf32>
    %128 = vector.broadcast %26 : vector<40x1xf32> to vector<40x128xf32>
    %129 = arith.mulf %127, %128 : vector<40x128xf32>
    %130 = arith.addf %29, %129 : vector<40x128xf32>
    %c0_61 = arith.constant 0 : index
    %c0_62 = arith.constant 0 : index
    %131 = vector.load %arg8[%c0_61, %c0_62] : memref<40x128xf32, #tpu.memory_space<vmem>>, vector<40x128xf32>
    tpu.vector_store %arg8[%c0_61, %c0_62], %130 {strides = array<i32>} : memref<40x128xf32, #tpu.memory_space<vmem>>, vector<40x128xf32>,
    return
  }
}

</mosaic_0001>

<llo_original>
// kernel: tpu_custom_call.1
$region0: #{tpu_custom_call.1}
  #allocation0 [shape = 'u32[]', space=smem, size = 0x4, offset = 0x4, fixed_abs, tag = 'smem constant byte address 0x4 - core index']
  #allocation1 [shape = 'u32[72,128]{1,0:T(1,128)}', space=vmem, size = 0x9000, scoped, tag = 'internal scratch']
  #allocation2 [shape = 'f32[1]{0:T(128)S(6)}', space=smem, size = 0x200, scoped, tag = 'scoped memory for tpu_custom_call.1']
  %s0 = inlined_call_operand.hbm [shape: f32[40,128], index: 0, kind: input, shape index: {}, may-alias: {0,8}]
  %s1 = inlined_call_operand.vmem [shape: bf16[3,128,128], index: 1, kind: input, shape index: {}]
  %s2 = inlined_call_operand.hbm [shape: bf16[3,128,128], index: 2, kind: input, shape index: {}]
  %s3 = inlined_call_operand.vmem [shape: f32[128,4], index: 3, kind: input, shape index: {}]
  %s4 = inlined_call_operand.vmem [shape: f32[4,128], index: 4, kind: input, shape index: {}]
  %s5 = inlined_call_operand.vmem [shape: f32[2,4], index: 5, kind: input, shape index: {}]
  %s6 = inlined_call_operand.vmem [shape: f32[2,128], index: 6, kind: input, shape index: {}]
  %s7 = inlined_call_operand.<no memory space> [shape: f32[1], index: 7, kind: input, shape index: {}]
  %s8 = inlined_call_operand.hbm [shape: f32[40,128], index: 8, kind: output, shape index: {}, may-alias: {0,8}]
  %s9 = sld [smem:[#allocation0]]
  $region50: #{tpu_custom_call.1} parent=0
    _
  %s11 = ssub.s32 1, %s9
  %s12 = scalar_select 0, %s11, %s9
  %13 = sst [smem:[#allocation2]] %s7
  $region1: #{tpu_custom_call.1} parent=0
    #allocation3 [shape = 'u8[20480]{0}', space=vmem, size = 0x5000, scoped, tag = 'input window, operand 0, single buffered']
    #allocation4 [shape = 's32[1]{0}', space=sflag, size = 0x4, scoped, tag = 'scoped memory for tpu_custom_call.1']
    #allocation5 [shape = 's32[1]{0}', space=sflag, size = 0x4, scoped, tag = 'scoped memory for tpu_custom_call.1']
    #allocation6 [shape = 'u8[98304]{0}', space=vmem, size = 0x18000, scoped, tag = 'input window, operand 2, single buffered']
    #allocation7 [shape = 's32[1]{0}', space=sflag, size = 0x4, scoped, tag = 'scoped memory for tpu_custom_call.1']
    #allocation8 [shape = 'u8[20480]{0}', space=vmem, size = 0x5000, scoped, tag = 'output window, operand 0, single buffered']
    %14 = vsyncpa [#allocation4], 0
    %15 = vsyncpa [#allocation7], 0
    %16 = vsyncpa [#allocation5], 0
    // Predicated region
    $region2: #{tpu_custom_call.1} parent=1 // pred_check
      _
    $region3: #{tpu_custom_call.1} parent=1 // pred_check_branch
      %18 = sbr.rel (0) target = $region5
    $region4: #{tpu_custom_call.1} parent=1 // pred_region
      %20 = vsyncadd [#allocation4], 0
      %s21 = sshll.u32 %s0, 4
      %s22 = int_to_ptr.hbm [resolvable:$true] %s21
      %s23 = sshll.u32 [#allocation3], 4
      %s24 = int_to_ptr.vmem [resolvable:$true] %s23
      %29 = dma.hbm_to_vmem [thread:$0]  %s22, 640, %s24, [#allocation4], 128, 128, 8
    $region5: #{tpu_custom_call.1} parent=1 // pred_fallthru
      _
    // Predicated region
    $region6: #{tpu_custom_call.1} parent=1 // pred_check
      _
    $region7: #{tpu_custom_call.1} parent=1 // pred_check_branch
      %31 = sbr.rel (0) target = $region9
    $region8: #{tpu_custom_call.1} parent=1 // pred_region
      _
    $region9: #{tpu_custom_call.1} parent=1 // pred_fallthru
      _
    // Predicated region
    $region10: #{tpu_custom_call.1} parent=1 // pred_check
      _
    $region11: #{tpu_custom_call.1} parent=1 // pred_check_branch
      %33 = sbr.rel (0) target = $region13
    $region12: #{tpu_custom_call.1} parent=1 // pred_region
      %35 = vsyncadd [#allocation7], 0
      %s36 = sshll.u32 %s2, 4
      %s37 = int_to_ptr.hbm [resolvable:$true] %s36
      %s38 = sshll.u32 [#allocation6], 4
      %s39 = int_to_ptr.vmem [resolvable:$true] %s38
      %44 = dma.hbm_to_vmem [thread:$0]  %s37, 3072, %s39, [#allocation7], 64, 64, 4
    $region13: #{tpu_custom_call.1} parent=1 // pred_fallthru
      _
    // Predicated region
    $region14: #{tpu_custom_call.1} parent=1 // pred_check
      _
    $region15: #{tpu_custom_call.1} parent=1 // pred_check_branch
      %46 = sbr.rel (0) target = $region17
    $region16: #{tpu_custom_call.1} parent=1 // pred_region
      _
    $region17: #{tpu_custom_call.1} parent=1 // pred_fallthru
      _
    // Predicated region
    $region18: #{tpu_custom_call.1} parent=1 // pred_check
      _
    $region19: #{tpu_custom_call.1} parent=1 // pred_check_branch
      %48 = sbr.rel (0) target = $region21
    $region20: #{tpu_custom_call.1} parent=1 // pred_region
      _
    $region21: #{tpu_custom_call.1} parent=1 // pred_fallthru
      _
    // Predicated region
    $region22: #{tpu_custom_call.1} parent=1 // pred_check
      _
    $region23: #{tpu_custom_call.1} parent=1 // pred_check_branch
      %50 = sbr.rel (0) target = $region25
    $region24: #{tpu_custom_call.1} parent=1 // pred_region
      _
    $region25: #{tpu_custom_call.1} parent=1 // pred_fallthru
      _
    // Predicated region
    $region26: #{tpu_custom_call.1} parent=1 // pred_check
      _
    $region27: #{tpu_custom_call.1} parent=1 // pred_check_branch
      %52 = sbr.rel (0) target = $region29
    $region28: #{tpu_custom_call.1} parent=1 // pred_region
      _
    $region29: #{tpu_custom_call.1} parent=1 // pred_fallthru
      _
    // Predicated region
    $region30: #{tpu_custom_call.1} parent=1 // pred_check
      _
    $region31: #{tpu_custom_call.1} parent=1 // pred_check_branch
      %54 = sbr.rel (0) target = $region33
    $region32: #{tpu_custom_call.1} parent=1 // pred_region
      _
    $region33: #{tpu_custom_call.1} parent=1 // pred_fallthru
      _
    // Predicated region
    $region34: #{tpu_custom_call.1} parent=1 // pred_check
      _
    $region35: #{tpu_custom_call.1} parent=1 // pred_check_branch
      %56 = sbr.rel (0) target = $region37
    $region36: #{tpu_custom_call.1} parent=1 // pred_region
      %58 = dma.done [#allocation4], 640
    $region37: #{tpu_custom_call.1} parent=1 // pred_fallthru
      _
    // Predicated region
    $region38: #{tpu_custom_call.1} parent=1 // pred_check
      _
    $region39: #{tpu_custom_call.1} parent=1 // pred_check_branch
      %60 = sbr.rel (0) target = $region41
    $region40: #{tpu_custom_call.1} parent=1 // pred_region
      %62 = dma.done [#allocation7], 3072
    $region41: #{tpu_custom_call.1} parent=1 // pred_fallthru
      _
    %v63 = vlaneseq
    %v64 = vshrl.u32 %v63, 7
    %v65 = vadd.s32 %v64, 8
    %v66 = vadd.s32 %v64, 16
    %v67 = vadd.s32 %v64, 24
    %v68 = vadd.s32 %v64, 32
    %vm69 = vcmp.lt.s32.totalorder %v64, 0
    %v70 = vsub.s32 0, %v64
    %v71 = vsel %vm69, %v70, %v64
    %v72 = vand.u32 %v71, 65535
    %v73 = vshrl.u32 %v71, 16
    %v75 = vmul.u32 %v72, 14564
    %v76 = vmul.u32 %v72, 58254
    %v77 = vmul.u32 %v73, 14564
    %v78 = vmul.u32 %v73, 58254
    %v79 = vshll.u32 %v76, 16
    %v80 = vshrl.u32 %v76, 16
    %v81 = vshll.u32 %v77, 16
    %v82 = vshrl.u32 %v77, 16
    %vm83 = vc.u32 %v75, %v79
    %v84 = vsel %vm83, 1, 0
    %v85 = vadd.s32 %v75, %v79
    %v86 = vadd.s32 %v78, %v84
    %vm87 = vc.u32 %v85, %v81
    %v88 = vsel %vm87, 1, 0
    %v89 = vadd.s32 %v85, %v81
    %v90 = vadd.s32 %v86, %v88
    %v91 = vadd.s32 %v90, %v80
    %v92 = vadd.s32 %v91, %v82
    %v93 = vshrl.u32 %v92, 4
    %v94 = vmul.u32 %v93, 18
    %v95 = vsub.s32 %v71, %v94
    %v96 = vsub.s32 0, %v95
    %v97 = vsel %vm69, %v96, %v95
    %vm98 = vcmp.lt.s32.totalorder %v65, 0
    %v99 = vsub.s32 0, %v65
    %v100 = vsel %vm98, %v99, %v65
    %v101 = vand.u32 %v100, 65535
    %v102 = vshrl.u32 %v100, 16
    %v104 = vmul.u32 %v101, 14564
    %v105 = vmul.u32 %v101, 58254
    %v106 = vmul.u32 %v102, 14564
    %v107 = vmul.u32 %v102, 58254
    %v108 = vshll.u32 %v105, 16
    %v109 = vshrl.u32 %v105, 16
    %v110 = vshll.u32 %v106, 16
    %v111 = vshrl.u32 %v106, 16
    %vm112 = vc.u32 %v104, %v108
    %v113 = vsel %vm112, 1, 0
    %v114 = vadd.s32 %v104, %v108
    %v115 = vadd.s32 %v107, %v113
    %vm116 = vc.u32 %v114, %v110
    %v117 = vsel %vm116, 1, 0
    %v118 = vadd.s32 %v114, %v110
    %v119 = vadd.s32 %v115, %v117
    %v120 = vadd.s32 %v119, %v109
    %v121 = vadd.s32 %v120, %v111
    %v122 = vshrl.u32 %v121, 4
    %v123 = vmul.u32 %v122, 18
    %v124 = vsub.s32 %v100, %v123
    %v125 = vsub.s32 0, %v124
    %v126 = vsel %vm98, %v125, %v124
    %vm127 = vcmp.lt.s32.totalorder %v66, 0
    %v128 = vsub.s32 0, %v66
    %v129 = vsel %vm127, %v128, %v66
    %v130 = vand.u32 %v129, 65535
    %v131 = vshrl.u32 %v129, 16
    %v133 = vmul.u32 %v130, 14564
    %v134 = vmul.u32 %v130, 58254
    %v135 = vmul.u32 %v131, 14564
    %v136 = vmul.u32 %v131, 58254
    %v137 = vshll.u32 %v134, 16
    %v138 = vshrl.u32 %v134, 16
    %v139 = vshll.u32 %v135, 16
    %v140 = vshrl.u32 %v135, 16
    %vm141 = vc.u32 %v133, %v137
    %v142 = vsel %vm141, 1, 0
    %v143 = vadd.s32 %v133, %v137
    %v144 = vadd.s32 %v136, %v142
    %vm145 = vc.u32 %v143, %v139
    %v146 = vsel %vm145, 1, 0
    %v147 = vadd.s32 %v143, %v139
    %v148 = vadd.s32 %v144, %v146
    %v149 = vadd.s32 %v148, %v138
    %v150 = vadd.s32 %v149, %v140
    %v151 = vshrl.u32 %v150, 4
    %v152 = vmul.u32 %v151, 18
    %v153 = vsub.s32 %v129, %v152
    %v154 = vsub.s32 0, %v153
    %v155 = vsel %vm127, %v154, %v153
    %vm156 = vcmp.lt.s32.totalorder %v67, 0
    %v157 = vsub.s32 0, %v67
    %v158 = vsel %vm156, %v157, %v67
    %v159 = vand.u32 %v158, 65535
    %v160 = vshrl.u32 %v158, 16
    %v162 = vmul.u32 %v159, 14564
    %v163 = vmul.u32 %v159, 58254
    %v164 = vmul.u32 %v160, 14564
    %v165 = vmul.u32 %v160, 58254
    %v166 = vshll.u32 %v163, 16
    %v167 = vshrl.u32 %v163, 16
    %v168 = vshll.u32 %v164, 16
    %v169 = vshrl.u32 %v164, 16
    %vm170 = vc.u32 %v162, %v166
    %v171 = vsel %vm170, 1, 0
    %v172 = vadd.s32 %v162, %v166
    %v173 = vadd.s32 %v165, %v171
    %vm174 = vc.u32 %v172, %v168
    %v175 = vsel %vm174, 1, 0
    %v176 = vadd.s32 %v172, %v168
    %v177 = vadd.s32 %v173, %v175
    %v178 = vadd.s32 %v177, %v167
    %v179 = vadd.s32 %v178, %v169
    %v180 = vshrl.u32 %v179, 4
    %v181 = vmul.u32 %v180, 18
    %v182 = vsub.s32 %v158, %v181
    %v183 = vsub.s32 0, %v182
    %v184 = vsel %vm156, %v183, %v182
    %vm185 = vcmp.lt.s32.totalorder %v68, 0
    %v186 = vsub.s32 0, %v68
    %v187 = vsel %vm185, %v186, %v68
    %v188 = vand.u32 %v187, 65535
    %v189 = vshrl.u32 %v187, 16
    %v191 = vmul.u32 %v188, 14564
    %v192 = vmul.u32 %v188, 58254
    %v193 = vmul.u32 %v189, 14564
    %v194 = vmul.u32 %v189, 58254
    %v195 = vshll.u32 %v192, 16
    %v196 = vshrl.u32 %v192, 16
    %v197 = vshll.u32 %v193, 16
    %v198 = vshrl.u32 %v193, 16
    %vm199 = vc.u32 %v191, %v195
    %v200 = vsel %vm199, 1, 0
    %v201 = vadd.s32 %v191, %v195
    %v202 = vadd.s32 %v194, %v200
    %vm203 = vc.u32 %v201, %v197
    %v204 = vsel %vm203, 1, 0
    %v205 = vadd.s32 %v201, %v197
    %v206 = vadd.s32 %v202, %v204
    %v207 = vadd.s32 %v206, %v196
    %v208 = vadd.s32 %v207, %v198
    %v209 = vshrl.u32 %v208, 4
    %v210 = vmul.u32 %v209, 18
    %v211 = vsub.s32 %v187, %v210
    %v212 = vsub.s32 0, %v211
    %v213 = vsel %vm185, %v212, %v211
    %vm214 = vcmp.ne.s32.totalorder %v97, 0
    %vm215 = vcmp.ne.s32.totalorder %v126, 0
    %vm216 = vcmp.ne.s32.totalorder %v155, 0
    %vm217 = vcmp.ne.s32.totalorder %v184, 0
    %vm218 = vcmp.ne.s32.totalorder %v213, 0
    %vm219 = vcmp.lt.s32.totalorder %v97, 0
    %vm220 = vcmp.lt.s32.totalorder %v126, 0
    %vm221 = vcmp.lt.s32.totalorder %v155, 0
    %vm222 = vcmp.lt.s32.totalorder %v184, 0
    %vm223 = vcmp.lt.s32.totalorder %v213, 0
    %vm224 = vmand %vm219, %vm214
    %vm225 = vmand %vm220, %vm215
    %vm226 = vmand %vm221, %vm216
    %vm227 = vmand %vm222, %vm217
    %vm228 = vmand %vm223, %vm218
    %v229 = vadd.s32 %v97, 18
    %v230 = vadd.s32 %v126, 18
    %v231 = vadd.s32 %v155, 18
    %v232 = vadd.s32 %v184, 18
    %v233 = vadd.s32 %v213, 18
    %v234 = vsel %vm224, %v229, %v97
    %v235 = vsel %vm225, %v230, %v126
    %v236 = vsel %vm226, %v231, %v155
    %v237 = vsel %vm227, %v232, %v184
    %v238 = vsel %vm228, %v233, %v213
    %vm239 = vcmp.ge.s32.totalorder %v234, 1
    %vm240 = vcmp.ge.s32.totalorder %v235, 1
    %vm241 = vcmp.ge.s32.totalorder %v236, 1
    %vm242 = vcmp.ge.s32.totalorder %v237, 1
    %vm243 = vcmp.ge.s32.totalorder %v238, 1
    %vm244 = vcmp.le.s32.totalorder %v234, 16
    %vm245 = vcmp.le.s32.totalorder %v235, 16
    %vm246 = vcmp.le.s32.totalorder %v236, 16
    %vm247 = vcmp.le.s32.totalorder %v237, 16
    %vm248 = vcmp.le.s32.totalorder %v238, 16
    %vm249 = vmand %vm239, %vm244
    %vm250 = vmand %vm240, %vm245
    %vm251 = vmand %vm241, %vm246
    %vm252 = vmand %vm242, %vm247
    %vm253 = vmand %vm243, %vm248
    %vm254 = vcmp.lt.s32.totalorder %v64, 36
    %vm255 = vcmp.lt.s32.totalorder %v65, 36
    %vm256 = vcmp.lt.s32.totalorder %v66, 36
    %vm257 = vcmp.lt.s32.totalorder %v67, 36
    %vm258 = vcmp.lt.s32.totalorder %v68, 36
    %vm259 = vmand %vm249, %vm254
    %vm260 = vmand %vm250, %vm255
    %vm261 = vmand %vm251, %vm256
    %vm262 = vmand %vm252, %vm257
    %vm263 = vmand %vm253, %vm258
    %v264 = vsel %vm259, 1, 0
    %v265 = vsel %vm260, 1, 0
    %v266 = vsel %vm261, 1, 0
    %v267 = vsel %vm262, 1, 0
    %v268 = vsel %vm263, 1, 0
    %v269 = vcvt.s32.f32 %v264
    %v270 = vcvt.s32.f32 %v265
    %v271 = vcvt.s32.f32 %v266
    %v272 = vcvt.s32.f32 %v267
    %v273 = vcvt.s32.f32 %v268
    %v274 = vld [vmem:[%s3] sm:$0xff]
    %v275 = vld [vmem:[%s3 + $0x8] sm:$0xff]
    %v276 = vld [vmem:[%s3 + $0x10] sm:$0xff]
    %v277 = vld [vmem:[%s3 + $0x18] sm:$0xff]
    %v278 = vld [vmem:[%s3 + $0x20] sm:$0xff]
    %v279 = vld [vmem:[%s3 + $0x28] sm:$0xff]
    %v280 = vld [vmem:[%s3 + $0x30] sm:$0xff]
    %v281 = vld [vmem:[%s3 + $0x38] sm:$0xff]
    %v282 = vld [vmem:[%s3 + $0x40] sm:$0xff]
    %v283 = vld [vmem:[%s3 + $0x48] sm:$0xff]
    %v284 = vld [vmem:[%s3 + $0x50] sm:$0xff]
    %v285 = vld [vmem:[%s3 + $0x58] sm:$0xff]
    %v286 = vld [vmem:[%s3 + $0x60] sm:$0xff]
    %v287 = vld [vmem:[%s3 + $0x68] sm:$0xff]
    %v288 = vld [vmem:[%s3 + $0x70] sm:$0xff]
    %v289 = vld [vmem:[%s3 + $0x78] sm:$0xff]
    %v290 = vld [vmem:[%s4] sm:$0xf]
    %v291 = vld [vmem:[#allocation3] sm:$0xff]
    %v292 = vld [vmem:[#allocation3 + $0x8] sm:$0xff]
    %v293 = vld [vmem:[#allocation3 + $0x10] sm:$0xff]
    %v294 = vld [vmem:[#allocation3 + $0x18] sm:$0xff]
    %v295 = vld [vmem:[#allocation3 + $0x20] sm:$0xff]
    %v296 = vpack.c.bf16 %v292, %v291
    %v297 = vpack.c.bf16 %v294, %v293
    %v298 = vpack.c.bf16 %v295, %v295
    %v299 = vrot.slane %v291, 7
    %v300 = vrot.slane %v292, 7
    %v301 = vrot.slane %v293, 7
    %v302 = vrot.slane %v294, 7
    %v303 = vrot.slane %v295, 7
    %vm304 = vcmp.lt.s32.totalorder %v64, 1
    %v305 = vsel %vm304, %v302, %v303
    %v306 = vsel %vm304, %v301, %v302
    %v307 = vsel %vm304, %v300, %v301
    %v308 = vsel %vm304, %v299, %v300
    %v309 = vsel %vm304, %v303, %v299
    %v310 = vpack.c.bf16 %v308, %v309
    %v311 = vpack.c.bf16 %v306, %v307
    %v312 = vpack.c.bf16 %v305, %v305
    %v313 = vrot.slane %v291, 1
    %v314 = vrot.slane %v292, 1
    %v315 = vrot.slane %v293, 1
    %v316 = vrot.slane %v294, 1
    %v317 = vrot.slane %v295, 1
    %vm318 = vcmp.lt.s32.totalorder %v64, 7
    %v319 = vsel %vm318, %v316, %v317
    %v320 = vsel %vm318, %v315, %v316
    %v321 = vsel %vm318, %v314, %v315
    %v322 = vsel %vm318, %v313, %v314
    %v323 = vsel %vm318, %v317, %v313
    %v324 = vpack.c.bf16 %v321, %v322
    %v325 = vpack.c.bf16 %v319, %v320
    %v326 = vpack.c.bf16 %v323, %v323
    %v327 = vld [vmem:[%s1] sm:$0xf]
    %v328 = vld [vmem:[%s1 + $0x4] sm:$0xf]
    %v329 = vld [vmem:[%s1 + $0x8] sm:$0xf]
    %v330 = vld [vmem:[%s1 + $0xc] sm:$0xf]
    %v331 = vld [vmem:[%s1 + $0x10] sm:$0xf]
    %v332 = vld [vmem:[%s1 + $0x14] sm:$0xf]
    %v333 = vld [vmem:[%s1 + $0x18] sm:$0xf]
    %v334 = vld [vmem:[%s1 + $0x1c] sm:$0xf]
    %v335 = vld [vmem:[%s1 + $0x20] sm:$0xf]
    %v336 = vld [vmem:[%s1 + $0x24] sm:$0xf]
    %v337 = vld [vmem:[%s1 + $0x28] sm:$0xf]
    %v338 = vld [vmem:[%s1 + $0x2c] sm:$0xf]
    %v339 = vld [vmem:[%s1 + $0x30] sm:$0xf]
    %v340 = vld [vmem:[%s1 + $0x34] sm:$0xf]
    %v341 = vld [vmem:[%s1 + $0x38] sm:$0xf]
    %v342 = vld [vmem:[%s1 + $0x3c] sm:$0xf]
    %s343 = scalar_lea.vmem %s1, 64
    %v344 = vld [vmem:[%s343] sm:$0xf]
    %v345 = vld [vmem:[%s343 + $0x4] sm:$0xf]
    %v346 = vld [vmem:[%s343 + $0x8] sm:$0xf]
    %v347 = vld [vmem:[%s343 + $0xc] sm:$0xf]
    %v348 = vld [vmem:[%s343 + $0x10] sm:$0xf]
    %v349 = vld [vmem:[%s343 + $0x14] sm:$0xf]
    %v350 = vld [vmem:[%s343 + $0x18] sm:$0xf]
    %v351 = vld [vmem:[%s343 + $0x1c] sm:$0xf]
    %v352 = vld [vmem:[%s343 + $0x20] sm:$0xf]
    %v353 = vld [vmem:[%s343 + $0x24] sm:$0xf]
    %v354 = vld [vmem:[%s343 + $0x28] sm:$0xf]
    %v355 = vld [vmem:[%s343 + $0x2c] sm:$0xf]
    %v356 = vld [vmem:[%s343 + $0x30] sm:$0xf]
    %v357 = vld [vmem:[%s343 + $0x34] sm:$0xf]
    %v358 = vld [vmem:[%s343 + $0x38] sm:$0xf]
    %v359 = vld [vmem:[%s343 + $0x3c] sm:$0xf]
    %v376 = vunpack.c.l.b16 %v344
    %v377 = vunpack.c.l.b16 %v345
    %v378 = vunpack.c.l.b16 %v346
    %v379 = vunpack.c.l.b16 %v347
    %v380 = vunpack.c.l.b16 %v348
    %v381 = vunpack.c.l.b16 %v349
    %v382 = vunpack.c.l.b16 %v350
    %v383 = vunpack.c.l.b16 %v351
    %v384 = vunpack.c.l.b16 %v352
    %v385 = vunpack.c.l.b16 %v353
    %v386 = vunpack.c.l.b16 %v354
    %v387 = vunpack.c.l.b16 %v355
    %v388 = vunpack.c.l.b16 %v356
    %v389 = vunpack.c.l.b16 %v357
    %v390 = vunpack.c.l.b16 %v358
    %v391 = vunpack.c.l.b16 %v359
    %v392 = vpack.c.b16 %v377, %v376
    %v393 = vpack.c.b16 %v379, %v378
    %v394 = vpack.c.b16 %v381, %v380
    %v395 = vpack.c.b16 %v383, %v382
    %v396 = vpack.c.b16 %v385, %v384
    %v397 = vpack.c.b16 %v387, %v386
    %v398 = vpack.c.b16 %v389, %v388
    %v399 = vpack.c.b16 %v391, %v390
    %408 = vmatpush.bf16.msra.mxu0 %v399
    %409 = vmatpush.bf16.msra.mxu0 %v398
    %410 = vmatpush.bf16.msra.mxu0 %v397
    %411 = vmatpush.bf16.msra.mxu0 %v396
    %412 = vmatpush.bf16.msra.mxu0 %v395
    %413 = vmatpush.bf16.msra.mxu0 %v394
    %414 = vmatpush.bf16.msra.mxu0 %v393
    %415 = vmatpush.bf16.msra.mxu0 %v392
    %416 = vmatmul.bf16.gmra.mxu0 %v296
    %v417 = vpop.f32.mrf.mxu0
    %v418 = vadd.f32 0.0, %v417
    %v419 = vpop.f32.mrf.mxu0
    %v420 = vadd.f32 0.0, %v419
    %421 = vmatmul.bf16.gmra.mxu0 %v297
    %v422 = vpop.f32.mrf.mxu0
    %v423 = vadd.f32 0.0, %v422
    %v424 = vpop.f32.mrf.mxu0
    %v425 = vadd.f32 0.0, %v424
    %426 = vmatmul.bf16.gmra.mxu0 %v298
    %v427 = vpop.f32.mrf.mxu0
    %v428 = vadd.f32 0.0, %v427
    %v429 = vpop.f32.mrf.mxu0
    %430 = vdwg.mxu0
    %v447 = vunpack.c.l.b16 %v327
    %v448 = vunpack.c.l.b16 %v328
    %v449 = vunpack.c.l.b16 %v329
    %v450 = vunpack.c.l.b16 %v330
    %v451 = vunpack.c.l.b16 %v331
    %v452 = vunpack.c.l.b16 %v332
    %v453 = vunpack.c.l.b16 %v333
    %v454 = vunpack.c.l.b16 %v334
    %v455 = vunpack.c.l.b16 %v335
    %v456 = vunpack.c.l.b16 %v336
    %v457 = vunpack.c.l.b16 %v337
    %v458 = vunpack.c.l.b16 %v338
    %v459 = vunpack.c.l.b16 %v339
    %v460 = vunpack.c.l.b16 %v340
    %v461 = vunpack.c.l.b16 %v341
    %v462 = vunpack.c.l.b16 %v342
    %v463 = vpack.c.b16 %v448, %v447
    %v464 = vpack.c.b16 %v450, %v449
    %v465 = vpack.c.b16 %v452, %v451
    %v466 = vpack.c.b16 %v454, %v453
    %v467 = vpack.c.b16 %v456, %v455
    %v468 = vpack.c.b16 %v458, %v457
    %v469 = vpack.c.b16 %v460, %v459
    %v470 = vpack.c.b16 %v462, %v461
    %479 = vmatpush.bf16.msra.mxu0 %v470
    %480 = vmatpush.bf16.msra.mxu0 %v469
    %481 = vmatpush.bf16.msra.mxu0 %v468
    %482 = vmatpush.bf16.msra.mxu0 %v467
    %483 = vmatpush.bf16.msra.mxu0 %v466
    %484 = vmatpush.bf16.msra.mxu0 %v465
    %485 = vmatpush.bf16.msra.mxu0 %v464
    %486 = vmatpush.bf16.msra.mxu0 %v463
    %487 = vmatmul.bf16.gmra.mxu0 %v310
    %v488 = vpop.f32.mrf.mxu0
    %v489 = vadd.f32 %v418, %v488
    %v490 = vpop.f32.mrf.mxu0
    %v491 = vadd.f32 %v420, %v490
    %492 = vmatmul.bf16.gmra.mxu0 %v311
    %v493 = vpop.f32.mrf.mxu0
    %v494 = vadd.f32 %v423, %v493
    %v495 = vpop.f32.mrf.mxu0
    %v496 = vadd.f32 %v425, %v495
    %497 = vmatmul.bf16.gmra.mxu0 %v312
    %v498 = vpop.f32.mrf.mxu0
    %v499 = vadd.f32 %v428, %v498
    %v500 = vpop.f32.mrf.mxu0
    %501 = vdwg.mxu0
    %s502 = scalar_lea.vmem %s1, 128
    %v503 = vld [vmem:[%s502] sm:$0xf]
    %v504 = vld [vmem:[%s502 + $0x4] sm:$0xf]
    %v505 = vld [vmem:[%s502 + $0x8] sm:$0xf]
    %v506 = vld [vmem:[%s502 + $0xc] sm:$0xf]
    %v507 = vld [vmem:[%s502 + $0x10] sm:$0xf]
    %v508 = vld [vmem:[%s502 + $0x14] sm:$0xf]
    %v509 = vld [vmem:[%s502 + $0x18] sm:$0xf]
    %v510 = vld [vmem:[%s502 + $0x1c] sm:$0xf]
    %v511 = vld [vmem:[%s502 + $0x20] sm:$0xf]
    %v512 = vld [vmem:[%s502 + $0x24] sm:$0xf]
    %v513 = vld [vmem:[%s502 + $0x28] sm:$0xf]
    %v514 = vld [vmem:[%s502 + $0x2c] sm:$0xf]
    %v515 = vld [vmem:[%s502 + $0x30] sm:$0xf]
    %v516 = vld [vmem:[%s502 + $0x34] sm:$0xf]
    %v517 = vld [vmem:[%s502 + $0x38] sm:$0xf]
    %v518 = vld [vmem:[%s502 + $0x3c] sm:$0xf]
    %v535 = vunpack.c.l.b16 %v503
    %v536 = vunpack.c.l.b16 %v504
    %v537 = vunpack.c.l.b16 %v505
    %v538 = vunpack.c.l.b16 %v506
    %v539 = vunpack.c.l.b16 %v507
    %v540 = vunpack.c.l.b16 %v508
    %v541 = vunpack.c.l.b16 %v509
    %v542 = vunpack.c.l.b16 %v510
    %v543 = vunpack.c.l.b16 %v511
    %v544 = vunpack.c.l.b16 %v512
    %v545 = vunpack.c.l.b16 %v513
    %v546 = vunpack.c.l.b16 %v514
    %v547 = vunpack.c.l.b16 %v515
    %v548 = vunpack.c.l.b16 %v516
    %v549 = vunpack.c.l.b16 %v517
    %v550 = vunpack.c.l.b16 %v518
    %v551 = vpack.c.b16 %v536, %v535
    %v552 = vpack.c.b16 %v538, %v537
    %v553 = vpack.c.b16 %v540, %v539
    %v554 = vpack.c.b16 %v542, %v541
    %v555 = vpack.c.b16 %v544, %v543
    %v556 = vpack.c.b16 %v546, %v545
    %v557 = vpack.c.b16 %v548, %v547
    %v558 = vpack.c.b16 %v550, %v549
    %567 = vmatpush.bf16.msra.mxu0 %v558
    %568 = vmatpush.bf16.msra.mxu0 %v557
    %569 = vmatpush.bf16.msra.mxu0 %v556
    %570 = vmatpush.bf16.msra.mxu0 %v555
    %571 = vmatpush.bf16.msra.mxu0 %v554
    %572 = vmatpush.bf16.msra.mxu0 %v553
    %573 = vmatpush.bf16.msra.mxu0 %v552
    %574 = vmatpush.bf16.msra.mxu0 %v551
    %575 = vmatmul.bf16.gmra.mxu0 %v324
    %v576 = vpop.f32.mrf.mxu0
    %v577 = vadd.f32 0.0, %v576
    %v578 = vpop.f32.mrf.mxu0
    %v579 = vadd.f32 0.0, %v578
    %580 = vmatmul.bf16.gmra.mxu0 %v325
    %v581 = vpop.f32.mrf.mxu0
    %v582 = vadd.f32 0.0, %v581
    %v583 = vpop.f32.mrf.mxu0
    %v584 = vadd.f32 0.0, %v583
    %585 = vmatmul.bf16.gmra.mxu0 %v326
    %v586 = vpop.f32.mrf.mxu0
    %v587 = vadd.f32 0.0, %v586
    %v588 = vpop.f32.mrf.mxu0
    %589 = vdwg.mxu0
    %v590 = vadd.f32 %v489, %v577
    %v591 = vadd.f32 %v491, %v579
    %v592 = vadd.f32 %v494, %v582
    %v593 = vadd.f32 %v496, %v584
    %v594 = vadd.f32 %v499, %v587
    %v595 = vld [vmem:[%s5] sm:$0x1]
    %v596 = vld [vmem:[%s6] sm:$0x1]
    %v597 = vmul.f32 %v590, %v269
    %v598 = vmul.f32 %v591, %v270
    %v599 = vmul.f32 %v592, %v271
    %v600 = vmul.f32 %v593, %v272
    %v601 = vmul.f32 %v594, %v273
    %v602 = vadd.f32 %v597, %v598
    %v603 = vadd.f32 %v602, %v599
    %v604 = vadd.f32 %v603, %v600
    %v605 = vadd.f32 %v604, %v601
    %v606 = vrot.slane %v605, 4
    %v607 = vadd.f32 %v605, %v606
    %v608 = vrot.slane %v607, 2
    %v609 = vadd.f32 %v607, %v608
    %v610 = vrot.slane %v609, 1
    %v611 = vadd.f32 %v609, %v610
    %612 = vmatpush.msra.mxu0 %v289
    %613 = vmatpush.msra.mxu0 %v288
    %614 = vmatpush.msra.mxu0 %v287
    %615 = vmatpush.msra.mxu0 %v286
    %616 = vmatpush.msra.mxu0 %v285
    %617 = vmatpush.msra.mxu0 %v284
    %618 = vmatpush.msra.mxu0 %v283
    %619 = vmatpush.msra.mxu0 %v282
    %620 = vmatpush.msra.mxu0 %v281
    %621 = vmatpush.msra.mxu0 %v280
    %622 = vmatpush.msra.mxu0 %v279
    %623 = vmatpush.msra.mxu0 %v278
    %624 = vmatpush.msra.mxu0 %v277
    %625 = vmatpush.msra.mxu0 %v276
    %626 = vmatpush.msra.mxu0 %v275
    %627 = vmatpush.msra.mxu0 %v274
    %628 = vmatmul.f32.gmra.mxu0 %v611
    %v629 = vpop.f32.mrf.mxu0
    %v630 = vadd.f32 0.0, %v629
    %631 = vdwg.mxu0
    %v632 = vmul.f32 %v630, 0.001953125
    %vm633 = vcmask 31744
    %v635 = vsel %vm633, %v632, 0
    %vm637 = vcmask 1043456
    %v639 = vsel %vm637, %v290, 0
    %641 = vmatpush.msra.mxu0 0.0
    %642 = vmatpush.msra.mxu0 0.0
    %643 = vmatpush.msra.mxu0 0.0
    %644 = vmatpush.msra.mxu0 0.0
    %645 = vmatpush.msra.mxu0 0.0
    %646 = vmatpush.msra.mxu0 0.0
    %647 = vmatpush.msra.mxu0 0.0
    %648 = vmatpush.msra.mxu0 0.0
    %649 = vmatpush.msra.mxu0 0.0
    %650 = vmatpush.msra.mxu0 0.0
    %651 = vmatpush.msra.mxu0 0.0
    %652 = vmatpush.msra.mxu0 0.0
    %653 = vmatpush.msra.mxu0 0.0
    %654 = vmatpush.msra.mxu0 0.0
    %655 = vmatpush.msra.mxu0 0.0
    %656 = vmatpush.msra.mxu0 %v639
    %657 = vmatmul.f32.gmra.mxu0 %v635
    %v658 = vpop.f32.mrf.mxu0
    %v659 = vadd.f32 0.0, %v658
    %660 = vdwg.mxu0
    %v661 = vperm.slane %v659, 0
    %v662 = vsub.f32 %v590, %v661
    %v663 = vsub.f32 %v591, %v661
    %v664 = vsub.f32 %v592, %v661
    %v665 = vsub.f32 %v593, %v661
    %v666 = vsub.f32 %v594, %v661
    %v667 = vmul.f32 %v662, %v662
    %v668 = vmul.f32 %v663, %v663
    %v669 = vmul.f32 %v664, %v664
    %v670 = vmul.f32 %v665, %v665
    %v671 = vmul.f32 %v666, %v666
    %v672 = vmul.f32 %v667, %v269
    %v673 = vmul.f32 %v668, %v270
    %v674 = vmul.f32 %v669, %v271
    %v675 = vmul.f32 %v670, %v272
    %v676 = vmul.f32 %v671, %v273
    %v677 = vadd.f32 %v672, %v673
    %v678 = vadd.f32 %v677, %v674
    %v679 = vadd.f32 %v678, %v675
    %v680 = vadd.f32 %v679, %v676
    %v681 = vrot.slane %v680, 4
    %v682 = vadd.f32 %v680, %v681
    %v683 = vrot.slane %v682, 2
    %v684 = vadd.f32 %v682, %v683
    %v685 = vrot.slane %v684, 1
    %v686 = vadd.f32 %v684, %v685
    %687 = vmatpush.msra.mxu0 %v289
    %688 = vmatpush.msra.mxu0 %v288
    %689 = vmatpush.msra.mxu0 %v287
    %690 = vmatpush.msra.mxu0 %v286
    %691 = vmatpush.msra.mxu0 %v285
    %692 = vmatpush.msra.mxu0 %v284
    %693 = vmatpush.msra.mxu0 %v283
    %694 = vmatpush.msra.mxu0 %v282
    %695 = vmatpush.msra.mxu0 %v281
    %696 = vmatpush.msra.mxu0 %v280
    %697 = vmatpush.msra.mxu0 %v279
    %698 = vmatpush.msra.mxu0 %v278
    %699 = vmatpush.msra.mxu0 %v277
    %700 = vmatpush.msra.mxu0 %v276
    %701 = vmatpush.msra.mxu0 %v275
    %702 = vmatpush.msra.mxu0 %v274
    %703 = vmatmul.f32.gmra.mxu0 %v686
    %v704 = vpop.f32.mrf.mxu0
    %v705 = vadd.f32 0.0, %v704
    %706 = vdwg.mxu0
    %v707 = vmul.f32 %v705, 0.001953125
    %v708 = vadd.f32 %v707, 1e-05
    %v709 = vrsqrt.pop %v708
    %v710 = vmul.f32 %v709, %v708
    %v711 = vmul.f32 %v710, %v709
    %v712 = vmul.f32 0.5, %v711
    %v713 = vsub.f32 1.5, %v712
    %v714 = vmul.f32 %v709, %v713
    %vm715 = vweird.f32 %v708
    %vm716 = vweird.f32 %v709
    %vm717 = vmor %vm715, %vm716
    %v718 = vsel %vm717, %v709, %v714
    %v719 = vmul.f32 %v595, %v718
    %v721 = vsel %vm633, %v719, 0
    %723 = vmatpush.msra.mxu0 0.0
    %724 = vmatpush.msra.mxu0 0.0
    %725 = vmatpush.msra.mxu0 0.0
    %726 = vmatpush.msra.mxu0 0.0
    %727 = vmatpush.msra.mxu0 0.0
    %728 = vmatpush.msra.mxu0 0.0
    %729 = vmatpush.msra.mxu0 0.0
    %730 = vmatpush.msra.mxu0 0.0
    %731 = vmatpush.msra.mxu0 0.0
    %732 = vmatpush.msra.mxu0 0.0
    %733 = vmatpush.msra.mxu0 0.0
    %734 = vmatpush.msra.mxu0 0.0
    %735 = vmatpush.msra.mxu0 0.0
    %736 = vmatpush.msra.mxu0 0.0
    %737 = vmatpush.msra.mxu0 0.0
    %738 = vmatpush.msra.mxu0 %v639
    %739 = vmatmul.f32.gmra.mxu0 %v721
    %v740 = vpop.f32.mrf.mxu0
    %v741 = vadd.f32 0.0, %v740
    %742 = vdwg.mxu0
    %v743 = vperm.slane %v741, 0
    %v744 = vmul.f32 %v662, %v743
    %v745 = vmul.f32 %v663, %v743
    %v746 = vmul.f32 %v664, %v743
    %v747 = vmul.f32 %v665, %v743
    %v748 = vmul.f32 %v666, %v743
    %v749 = vperm.slane %v596, 0
    %v750 = vadd.f32 %v744, %v749
    %v751 = vadd.f32 %v745, %v749
    %v752 = vadd.f32 %v746, %v749
    %v753 = vadd.f32 %v747, %v749
    %v754 = vadd.f32 %v748, %v749
    %s755 = sld [smem:[#allocation2]]
    %vm756 = vcmp.ge.f32.partialorder %v750, 0.0
    %vm757 = vcmp.ge.f32.partialorder %v751, 0.0
    %vm758 = vcmp.ge.f32.partialorder %v752, 0.0
    %vm759 = vcmp.ge.f32.partialorder %v753, 0.0
    %vm760 = vcmp.ge.f32.partialorder %v754, 0.0
    %v761 = vstv %s755
    %v762 = vmul.f32 %v761, %v750
    %v763 = vmul.f32 %v761, %v751
    %v764 = vmul.f32 %v761, %v752
    %v765 = vmul.f32 %v761, %v753
    %v766 = vmul.f32 %v761, %v754
    %v767 = vsel %vm756, %v750, %v762
    %v768 = vsel %vm757, %v751, %v763
    %v769 = vsel %vm758, %v752, %v764
    %v770 = vsel %vm759, %v753, %v765
    %v771 = vsel %vm760, %v754, %v766
    %v772 = vmul.f32 %v767, %v269
    %v773 = vmul.f32 %v768, %v270
    %v774 = vmul.f32 %v769, %v271
    %v775 = vmul.f32 %v770, %v272
    %v776 = vmul.f32 %v771, %v273
    %v777 = vpack.c.bf16 %v773, %v772
    %v778 = vpack.c.bf16 %v775, %v774
    %v779 = vpack.c.bf16 %v776, %v776
    %v780 = vrot.slane %v772, 7
    %v781 = vrot.slane %v773, 7
    %v782 = vrot.slane %v774, 7
    %v783 = vrot.slane %v775, 7
    %v784 = vrot.slane %v776, 7
    %v785 = vsel %vm304, %v783, %v784
    %v786 = vsel %vm304, %v782, %v783
    %v787 = vsel %vm304, %v781, %v782
    %v788 = vsel %vm304, %v780, %v781
    %v789 = vsel %vm304, %v784, %v780
    %v790 = vpack.c.bf16 %v788, %v789
    %v791 = vpack.c.bf16 %v786, %v787
    %v792 = vpack.c.bf16 %v785, %v785
    %v793 = vrot.slane %v772, 1
    %v794 = vrot.slane %v773, 1
    %v795 = vrot.slane %v774, 1
    %v796 = vrot.slane %v775, 1
    %v797 = vrot.slane %v776, 1
    %v798 = vsel %vm318, %v796, %v797
    %v799 = vsel %vm318, %v795, %v796
    %v800 = vsel %vm318, %v794, %v795
    %v801 = vsel %vm318, %v793, %v794
    %v802 = vsel %vm318, %v797, %v793
    %v803 = vpack.c.bf16 %v800, %v801
    %v804 = vpack.c.bf16 %v798, %v799
    %v805 = vpack.c.bf16 %v802, %v802
    %v806 = vld [vmem:[#allocation6] sm:$0xf]
    %v807 = vld [vmem:[#allocation6 + $0x4] sm:$0xf]
    %v808 = vld [vmem:[#allocation6 + $0x8] sm:$0xf]
    %v809 = vld [vmem:[#allocation6 + $0xc] sm:$0xf]
    %v810 = vld [vmem:[#allocation6 + $0x10] sm:$0xf]
    %v811 = vld [vmem:[#allocation6 + $0x14] sm:$0xf]
    %v812 = vld [vmem:[#allocation6 + $0x18] sm:$0xf]
    %v813 = vld [vmem:[#allocation6 + $0x1c] sm:$0xf]
    %v814 = vld [vmem:[#allocation6 + $0x20] sm:$0xf]
    %v815 = vld [vmem:[#allocation6 + $0x24] sm:$0xf]
    %v816 = vld [vmem:[#allocation6 + $0x28] sm:$0xf]
    %v817 = vld [vmem:[#allocation6 + $0x2c] sm:$0xf]
    %v818 = vld [vmem:[#allocation6 + $0x30] sm:$0xf]
    %v819 = vld [vmem:[#allocation6 + $0x34] sm:$0xf]
    %v820 = vld [vmem:[#allocation6 + $0x38] sm:$0xf]
    %v821 = vld [vmem:[#allocation6 + $0x3c] sm:$0xf]
    %s822 = scalar_lea.vmem [#allocation6], 64
    %v823 = vld [vmem:[%s822] sm:$0xf]
    %v824 = vld [vmem:[%s822 + $0x4] sm:$0xf]
    %v825 = vld [vmem:[%s822 + $0x8] sm:$0xf]
    %v826 = vld [vmem:[%s822 + $0xc] sm:$0xf]
    %v827 = vld [vmem:[%s822 + $0x10] sm:$0xf]
    %v828 = vld [vmem:[%s822 + $0x14] sm:$0xf]
    %v829 = vld [vmem:[%s822 + $0x18] sm:$0xf]
    %v830 = vld [vmem:[%s822 + $0x1c] sm:$0xf]
    %v831 = vld [vmem:[%s822 + $0x20] sm:$0xf]
    %v832 = vld [vmem:[%s822 + $0x24] sm:$0xf]
    %v833 = vld [vmem:[%s822 + $0x28] sm:$0xf]
    %v834 = vld [vmem:[%s822 + $0x2c] sm:$0xf]
    %v835 = vld [vmem:[%s822 + $0x30] sm:$0xf]
    %v836 = vld [vmem:[%s822 + $0x34] sm:$0xf]
    %v837 = vld [vmem:[%s822 + $0x38] sm:$0xf]
    %v838 = vld [vmem:[%s822 + $0x3c] sm:$0xf]
    %v855 = vunpack.c.l.b16 %v823
    %v856 = vunpack.c.l.b16 %v824
    %v857 = vunpack.c.l.b16 %v825
    %v858 = vunpack.c.l.b16 %v826
    %v859 = vunpack.c.l.b16 %v827
    %v860 = vunpack.c.l.b16 %v828
    %v861 = vunpack.c.l.b16 %v829
    %v862 = vunpack.c.l.b16 %v830
    %v863 = vunpack.c.l.b16 %v831
    %v864 = vunpack.c.l.b16 %v832
    %v865 = vunpack.c.l.b16 %v833
    %v866 = vunpack.c.l.b16 %v834
    %v867 = vunpack.c.l.b16 %v835
    %v868 = vunpack.c.l.b16 %v836
    %v869 = vunpack.c.l.b16 %v837
    %v870 = vunpack.c.l.b16 %v838
    %v871 = vpack.c.b16 %v856, %v855
    %v872 = vpack.c.b16 %v858, %v857
    %v873 = vpack.c.b16 %v860, %v859
    %v874 = vpack.c.b16 %v862, %v861
    %v875 = vpack.c.b16 %v864, %v863
    %v876 = vpack.c.b16 %v866, %v865
    %v877 = vpack.c.b16 %v868, %v867
    %v878 = vpack.c.b16 %v870, %v869
    %887 = vmatpush.bf16.msra.mxu0 %v878
    %888 = vmatpush.bf16.msra.mxu0 %v877
    %889 = vmatpush.bf16.msra.mxu0 %v876
    %890 = vmatpush.bf16.msra.mxu0 %v875
    %891 = vmatpush.bf16.msra.mxu0 %v874
    %892 = vmatpush.bf16.msra.mxu0 %v873
    %893 = vmatpush.bf16.msra.mxu0 %v872
    %894 = vmatpush.bf16.msra.mxu0 %v871
    %895 = vmatmul.bf16.gmra.mxu0 %v777
    %v896 = vpop.f32.mrf.mxu0
    %v897 = vadd.f32 0.0, %v896
    %v898 = vpop.f32.mrf.mxu0
    %v899 = vadd.f32 0.0, %v898
    %900 = vmatmul.bf16.gmra.mxu0 %v778
    %v901 = vpop.f32.mrf.mxu0
    %v902 = vadd.f32 0.0, %v901
    %v903 = vpop.f32.mrf.mxu0
    %v904 = vadd.f32 0.0, %v903
    %905 = vmatmul.bf16.gmra.mxu0 %v779
    %v906 = vpop.f32.mrf.mxu0
    %v907 = vadd.f32 0.0, %v906
    %v908 = vpop.f32.mrf.mxu0
    %909 = vdwg.mxu0
    %v926 = vunpack.c.l.b16 %v806
    %v927 = vunpack.c.l.b16 %v807
    %v928 = vunpack.c.l.b16 %v808
    %v929 = vunpack.c.l.b16 %v809
    %v930 = vunpack.c.l.b16 %v810
    %v931 = vunpack.c.l.b16 %v811
    %v932 = vunpack.c.l.b16 %v812
    %v933 = vunpack.c.l.b16 %v813
    %v934 = vunpack.c.l.b16 %v814
    %v935 = vunpack.c.l.b16 %v815
    %v936 = vunpack.c.l.b16 %v816
    %v937 = vunpack.c.l.b16 %v817
    %v938 = vunpack.c.l.b16 %v818
    %v939 = vunpack.c.l.b16 %v819
    %v940 = vunpack.c.l.b16 %v820
    %v941 = vunpack.c.l.b16 %v821
    %v942 = vpack.c.b16 %v927, %v926
    %v943 = vpack.c.b16 %v929, %v928
    %v944 = vpack.c.b16 %v931, %v930
    %v945 = vpack.c.b16 %v933, %v932
    %v946 = vpack.c.b16 %v935, %v934
    %v947 = vpack.c.b16 %v937, %v936
    %v948 = vpack.c.b16 %v939, %v938
    %v949 = vpack.c.b16 %v941, %v940
    %958 = vmatpush.bf16.msra.mxu0 %v949
    %959 = vmatpush.bf16.msra.mxu0 %v948
    %960 = vmatpush.bf16.msra.mxu0 %v947
    %961 = vmatpush.bf16.msra.mxu0 %v946
    %962 = vmatpush.bf16.msra.mxu0 %v945
    %963 = vmatpush.bf16.msra.mxu0 %v944
    %964 = vmatpush.bf16.msra.mxu0 %v943
    %965 = vmatpush.bf16.msra.mxu0 %v942
    %966 = vmatmul.bf16.gmra.mxu0 %v790
    %v967 = vpop.f32.mrf.mxu0
    %v968 = vadd.f32 %v897, %v967
    %v969 = vpop.f32.mrf.mxu0
    %v970 = vadd.f32 %v899, %v969
    %971 = vmatmul.bf16.gmra.mxu0 %v791
    %v972 = vpop.f32.mrf.mxu0
    %v973 = vadd.f32 %v902, %v972
    %v974 = vpop.f32.mrf.mxu0
    %v975 = vadd.f32 %v904, %v974
    %976 = vmatmul.bf16.gmra.mxu0 %v792
    %v977 = vpop.f32.mrf.mxu0
    %v978 = vadd.f32 %v907, %v977
    %v979 = vpop.f32.mrf.mxu0
    %980 = vdwg.mxu0
    %s981 = scalar_lea.vmem [#allocation6], 128
    %v982 = vld [vmem:[%s981] sm:$0xf]
    %v983 = vld [vmem:[%s981 + $0x4] sm:$0xf]
    %v984 = vld [vmem:[%s981 + $0x8] sm:$0xf]
    %v985 = vld [vmem:[%s981 + $0xc] sm:$0xf]
    %v986 = vld [vmem:[%s981 + $0x10] sm:$0xf]
    %v987 = vld [vmem:[%s981 + $0x14] sm:$0xf]
    %v988 = vld [vmem:[%s981 + $0x18] sm:$0xf]
    %v989 = vld [vmem:[%s981 + $0x1c] sm:$0xf]
    %v990 = vld [vmem:[%s981 + $0x20] sm:$0xf]
    %v991 = vld [vmem:[%s981 + $0x24] sm:$0xf]
    %v992 = vld [vmem:[%s981 + $0x28] sm:$0xf]
    %v993 = vld [vmem:[%s981 + $0x2c] sm:$0xf]
    %v994 = vld [vmem:[%s981 + $0x30] sm:$0xf]
    %v995 = vld [vmem:[%s981 + $0x34] sm:$0xf]
    %v996 = vld [vmem:[%s981 + $0x38] sm:$0xf]
    %v997 = vld [vmem:[%s981 + $0x3c] sm:$0xf]
    %v1014 = vunpack.c.l.b16 %v982
    %v1015 = vunpack.c.l.b16 %v983
    %v1016 = vunpack.c.l.b16 %v984
    %v1017 = vunpack.c.l.b16 %v985
    %v1018 = vunpack.c.l.b16 %v986
    %v1019 = vunpack.c.l.b16 %v987
    %v1020 = vunpack.c.l.b16 %v988
    %v1021 = vunpack.c.l.b16 %v989
    %v1022 = vunpack.c.l.b16 %v990
    %v1023 = vunpack.c.l.b16 %v991
    %v1024 = vunpack.c.l.b16 %v992
    %v1025 = vunpack.c.l.b16 %v993
    %v1026 = vunpack.c.l.b16 %v994
    %v1027 = vunpack.c.l.b16 %v995
    %v1028 = vunpack.c.l.b16 %v996
    %v1029 = vunpack.c.l.b16 %v997
    %v1030 = vpack.c.b16 %v1015, %v1014
    %v1031 = vpack.c.b16 %v1017, %v1016
    %v1032 = vpack.c.b16 %v1019, %v1018
    %v1033 = vpack.c.b16 %v1021, %v1020
    %v1034 = vpack.c.b16 %v1023, %v1022
    %v1035 = vpack.c.b16 %v1025, %v1024
    %v1036 = vpack.c.b16 %v1027, %v1026
    %v1037 = vpack.c.b16 %v1029, %v1028
    %1046 = vmatpush.bf16.msra.mxu0 %v1037
    %1047 = vmatpush.bf16.msra.mxu0 %v1036
    %1048 = vmatpush.bf16.msra.mxu0 %v1035
    %1049 = vmatpush.bf16.msra.mxu0 %v1034
    %1050 = vmatpush.bf16.msra.mxu0 %v1033
    %1051 = vmatpush.bf16.msra.mxu0 %v1032
    %1052 = vmatpush.bf16.msra.mxu0 %v1031
    %1053 = vmatpush.bf16.msra.mxu0 %v1030
    %1054 = vmatmul.bf16.gmra.mxu0 %v803
    %v1055 = vpop.f32.mrf.mxu0
    %v1056 = vadd.f32 0.0, %v1055
    %v1057 = vpop.f32.mrf.mxu0
    %v1058 = vadd.f32 0.0, %v1057
    %1059 = vmatmul.bf16.gmra.mxu0 %v804
    %v1060 = vpop.f32.mrf.mxu0
    %v1061 = vadd.f32 0.0, %v1060
    %v1062 = vpop.f32.mrf.mxu0
    %v1063 = vadd.f32 0.0, %v1062
    %1064 = vmatmul.bf16.gmra.mxu0 %v805
    %v1065 = vpop.f32.mrf.mxu0
    %v1066 = vadd.f32 0.0, %v1065
    %v1067 = vpop.f32.mrf.mxu0
    %1068 = vdwg.mxu0
    %v1069 = vadd.f32 %v968, %v1056
    %v1070 = vadd.f32 %v970, %v1058
    %v1071 = vadd.f32 %v973, %v1061
    %v1072 = vadd.f32 %v975, %v1063
    %v1073 = vadd.f32 %v978, %v1066
    %v1074 = vld [vmem:[%s5 + $0x1] sm:$0x1]
    %v1075 = vld [vmem:[%s6 + $0x1] sm:$0x1]
    %v1076 = vmul.f32 %v1069, %v269
    %v1077 = vmul.f32 %v1070, %v270
    %v1078 = vmul.f32 %v1071, %v271
    %v1079 = vmul.f32 %v1072, %v272
    %v1080 = vmul.f32 %v1073, %v273
    %v1081 = vadd.f32 %v1076, %v1077
    %v1082 = vadd.f32 %v1081, %v1078
    %v1083 = vadd.f32 %v1082, %v1079
    %v1084 = vadd.f32 %v1083, %v1080
    %v1085 = vrot.slane %v1084, 4
    %v1086 = vadd.f32 %v1084, %v1085
    %v1087 = vrot.slane %v1086, 2
    %v1088 = vadd.f32 %v1086, %v1087
    %v1089 = vrot.slane %v1088, 1
    %v1090 = vadd.f32 %v1088, %v1089
    %1091 = vmatpush.msra.mxu0 %v289
    %1092 = vmatpush.msra.mxu0 %v288
    %1093 = vmatpush.msra.mxu0 %v287
    %1094 = vmatpush.msra.mxu0 %v286
    %1095 = vmatpush.msra.mxu0 %v285
    %1096 = vmatpush.msra.mxu0 %v284
    %1097 = vmatpush.msra.mxu0 %v283
    %1098 = vmatpush.msra.mxu0 %v282
    %1099 = vmatpush.msra.mxu0 %v281
    %1100 = vmatpush.msra.mxu0 %v280
    %1101 = vmatpush.msra.mxu0 %v279
    %1102 = vmatpush.msra.mxu0 %v278
    %1103 = vmatpush.msra.mxu0 %v277
    %1104 = vmatpush.msra.mxu0 %v276
    %1105 = vmatpush.msra.mxu0 %v275
    %1106 = vmatpush.msra.mxu0 %v274
    %1107 = vmatmul.f32.gmra.mxu0 %v1090
    %v1108 = vpop.f32.mrf.mxu0
    %v1109 = vadd.f32 0.0, %v1108
    %1110 = vdwg.mxu0
    %v1111 = vmul.f32 %v1109, 0.001953125
    %v1113 = vsel %vm633, %v1111, 0
    %1115 = vmatpush.msra.mxu0 0.0
    %1116 = vmatpush.msra.mxu0 0.0
    %1117 = vmatpush.msra.mxu0 0.0
    %1118 = vmatpush.msra.mxu0 0.0
    %1119 = vmatpush.msra.mxu0 0.0
    %1120 = vmatpush.msra.mxu0 0.0
    %1121 = vmatpush.msra.mxu0 0.0
    %1122 = vmatpush.msra.mxu0 0.0
    %1123 = vmatpush.msra.mxu0 0.0
    %1124 = vmatpush.msra.mxu0 0.0
    %1125 = vmatpush.msra.mxu0 0.0
    %1126 = vmatpush.msra.mxu0 0.0
    %1127 = vmatpush.msra.mxu0 0.0
    %1128 = vmatpush.msra.mxu0 0.0
    %1129 = vmatpush.msra.mxu0 0.0
    %1130 = vmatpush.msra.mxu0 %v639
    %1131 = vmatmul.f32.gmra.mxu0 %v1113
    %v1132 = vpop.f32.mrf.mxu0
    %v1133 = vadd.f32 0.0, %v1132
    %1134 = vdwg.mxu0
    %v1135 = vperm.slane %v1133, 0
    %v1136 = vsub.f32 %v1069, %v1135
    %v1137 = vsub.f32 %v1070, %v1135
    %v1138 = vsub.f32 %v1071, %v1135
    %v1139 = vsub.f32 %v1072, %v1135
    %v1140 = vsub.f32 %v1073, %v1135
    %v1141 = vmul.f32 %v1136, %v1136
    %v1142 = vmul.f32 %v1137, %v1137
    %v1143 = vmul.f32 %v1138, %v1138
    %v1144 = vmul.f32 %v1139, %v1139
    %v1145 = vmul.f32 %v1140, %v1140
    %v1146 = vmul.f32 %v1141, %v269
    %v1147 = vmul.f32 %v1142, %v270
    %v1148 = vmul.f32 %v1143, %v271
    %v1149 = vmul.f32 %v1144, %v272
    %v1150 = vmul.f32 %v1145, %v273
    %v1151 = vadd.f32 %v1146, %v1147
    %v1152 = vadd.f32 %v1151, %v1148
    %v1153 = vadd.f32 %v1152, %v1149
    %v1154 = vadd.f32 %v1153, %v1150
    %v1155 = vrot.slane %v1154, 4
    %v1156 = vadd.f32 %v1154, %v1155
    %v1157 = vrot.slane %v1156, 2
    %v1158 = vadd.f32 %v1156, %v1157
    %v1159 = vrot.slane %v1158, 1
    %v1160 = vadd.f32 %v1158, %v1159
    %1161 = vmatpush.msra.mxu0 %v289
    %1162 = vmatpush.msra.mxu0 %v288
    %1163 = vmatpush.msra.mxu0 %v287
    %1164 = vmatpush.msra.mxu0 %v286
    %1165 = vmatpush.msra.mxu0 %v285
    %1166 = vmatpush.msra.mxu0 %v284
    %1167 = vmatpush.msra.mxu0 %v283
    %1168 = vmatpush.msra.mxu0 %v282
    %1169 = vmatpush.msra.mxu0 %v281
    %1170 = vmatpush.msra.mxu0 %v280
    %1171 = vmatpush.msra.mxu0 %v279
    %1172 = vmatpush.msra.mxu0 %v278
    %1173 = vmatpush.msra.mxu0 %v277
    %1174 = vmatpush.msra.mxu0 %v276
    %1175 = vmatpush.msra.mxu0 %v275
    %1176 = vmatpush.msra.mxu0 %v274
    %1177 = vmatmul.f32.gmra.mxu0 %v1160
    %v1178 = vpop.f32.mrf.mxu0
    %v1179 = vadd.f32 0.0, %v1178
    %1180 = vdwg.mxu0
    %v1181 = vmul.f32 %v1179, 0.001953125
    %v1182 = vadd.f32 %v1181, 1e-05
    %v1183 = vrsqrt.pop %v1182
    %v1184 = vmul.f32 %v1183, %v1182
    %v1185 = vmul.f32 %v1184, %v1183
    %v1186 = vmul.f32 0.5, %v1185
    %v1187 = vsub.f32 1.5, %v1186
    %v1188 = vmul.f32 %v1183, %v1187
    %vm1189 = vweird.f32 %v1182
    %vm1190 = vweird.f32 %v1183
    %vm1191 = vmor %vm1189, %vm1190
    %v1192 = vsel %vm1191, %v1183, %v1188
    %v1193 = vmul.f32 %v1074, %v1192
    %v1195 = vsel %vm633, %v1193, 0
    %1197 = vmatpush.msra.mxu0 0.0
    %1198 = vmatpush.msra.mxu0 0.0
    %1199 = vmatpush.msra.mxu0 0.0
    %1200 = vmatpush.msra.mxu0 0.0
    %1201 = vmatpush.msra.mxu0 0.0
    %1202 = vmatpush.msra.mxu0 0.0
    %1203 = vmatpush.msra.mxu0 0.0
    %1204 = vmatpush.msra.mxu0 0.0
    %1205 = vmatpush.msra.mxu0 0.0
    %1206 = vmatpush.msra.mxu0 0.0
    %1207 = vmatpush.msra.mxu0 0.0
    %1208 = vmatpush.msra.mxu0 0.0
    %1209 = vmatpush.msra.mxu0 0.0
    %1210 = vmatpush.msra.mxu0 0.0
    %1211 = vmatpush.msra.mxu0 0.0
    %1212 = vmatpush.msra.mxu0 %v639
    %1213 = vmatmul.f32.gmra.mxu0 %v1195
    %v1214 = vpop.f32.mrf.mxu0
    %v1215 = vadd.f32 0.0, %v1214
    %1216 = vdwg.mxu0
    %v1217 = vperm.slane %v1215, 0
    %v1218 = vmul.f32 %v1136, %v1217
    %v1219 = vmul.f32 %v1137, %v1217
    %v1220 = vmul.f32 %v1138, %v1217
    %v1221 = vmul.f32 %v1139, %v1217
    %v1222 = vmul.f32 %v1140, %v1217
    %v1223 = vperm.slane %v1075, 0
    %v1224 = vadd.f32 %v1218, %v1223
    %v1225 = vadd.f32 %v1219, %v1223
    %v1226 = vadd.f32 %v1220, %v1223
    %v1227 = vadd.f32 %v1221, %v1223
    %v1228 = vadd.f32 %v1222, %v1223
    %v1229 = vmul.f32 %v1224, %v269
    %v1230 = vmul.f32 %v1225, %v270
    %v1231 = vmul.f32 %v1226, %v271
    %v1232 = vmul.f32 %v1227, %v272
    %v1233 = vmul.f32 %v1228, %v273
    %v1234 = vadd.f32 %v291, %v1229
    %v1235 = vadd.f32 %v292, %v1230
    %v1236 = vadd.f32 %v293, %v1231
    %v1237 = vadd.f32 %v294, %v1232
    %v1238 = vadd.f32 %v295, %v1233
    %1239 = vst [vmem:[#allocation8] sm:$0xff] %v1234
    %1240 = vst [vmem:[#allocation8 + $0x8] sm:$0xff] %v1235
    %1241 = vst [vmem:[#allocation8 + $0x10] sm:$0xff] %v1236
    %1242 = vst [vmem:[#allocation8 + $0x18] sm:$0xff] %v1237
    %1243 = vst [vmem:[#allocation8 + $0x20] sm:$0xff] %v1238
    // Predicated region
    $region42: #{tpu_custom_call.1} parent=1 // pred_check
      _
    $region43: #{tpu_custom_call.1} parent=1 // pred_check_branch
      %1245 = sbr.rel (0) target = $region45
    $region44: #{tpu_custom_call.1} parent=1 // pred_region
      %1247 = vsyncadd [#allocation5], 0
      %s1248 = sshll.u32 [#allocation8], 4
      %s1249 = int_to_ptr.vmem [resolvable:$true] %s1248
      %s1250 = sshll.u32 %s8, 4
      %s1251 = int_to_ptr.hbm [resolvable:$true] %s1250
      %1256 = dma.vmem_to_hbm [thread:$0]  %s1249, 640, %s1251, [#allocation5], 128, 128, 8
    $region45: #{tpu_custom_call.1} parent=1 // pred_fallthru
      _
    // Predicated region
    $region46: #{tpu_custom_call.1} parent=1 // pred_check
      _
    $region47: #{tpu_custom_call.1} parent=1 // pred_check_branch
      %1258 = sbr.rel (0) target = $region49
    $region48: #{tpu_custom_call.1} parent=1 // pred_region
      %1260 = dma.done [#allocation5], 640
    $region49: #{tpu_custom_call.1} parent=1 // pred_fallthru
      _
    %1261 = vsyncpa [#allocation4], 1
    %1262 = vsyncpa [#allocation7], 1
    %1263 = vsyncpa [#allocation5], 1

</llo_original>
